<compile_context>
chip_gen: v7x
topology: tpu7x:2x2x1
jax: 0.10.0
libtpu: 0.0.40
codegen_flags: <defaults>
</compile_context>

<pallas_src>
import jax
import jax.numpy as jnp
from jax.experimental import pallas as pl
from jax.experimental.pallas import tpu as pltpu


def _round_up(a, b):
    return ((a + b - 1) // b) * b


def _dice_kernel(x_ref, t_ref, inter_out, denom_out, inter_acc, denom_acc):
    # x_ref / t_ref: (N, tile_r, 128) blocks of the flattened inputs.
    k = pl.program_id(1)

    @pl.when(k == 0)
    def _():
        inter_acc[...] = jnp.zeros_like(inter_acc)
        denom_acc[...] = jnp.zeros_like(denom_acc)

    x = x_ref[...].astype(jnp.float32)
    t = t_ref[...].astype(jnp.float32)

    # Two reductions per step (merged numerator / denominator streams),
    # reduced only over the sublane axis; lane-partials accumulate in VMEM.
    inter_acc[...] += jnp.sum(x * t, axis=1)  # (N, 128)
    denom_acc[...] += jnp.sum(x + t, axis=1)  # (N, 128)

    @pl.when(k == pl.num_programs(1) - 1)
    def _():
        inter_out[...] = jnp.sum(inter_acc[...], axis=1).reshape(inter_out.shape)
        denom_out[...] = jnp.sum(denom_acc[...], axis=1).reshape(denom_out.shape)


def dice_loss(inp, target, *, target_block_bytes=2 * 1024 * 1024):
    """inp, target: (N, C, H, W) arrays (any float dtype). Returns scalar f32 loss."""
    N = inp.shape[0]
    x = inp.reshape(N, -1)
    t = target.reshape(N, -1)
    D = x.shape[1]

    LANES = 128
    SUB = 16  # sublane multiple (works for f32 and packed bf16)

    x_bytes = jnp.dtype(x.dtype).itemsize
    t_bytes = jnp.dtype(t.dtype).itemsize
    itemsize = max(x_bytes, t_bytes)

    # Rows of 128 lanes needed to hold D elements.
    R = _round_up(D, LANES) // LANES

    # Rows per tile targeting ~target_block_bytes per input block.
    target_rows = max(SUB, target_block_bytes // max(1, N * LANES * itemsize))
    target_rows = max(SUB, (target_rows // SUB) * SUB)
    # Never tile wider than half of the (padded) data: 2-way parallel split.
    half_rows = _round_up(max(1, (R + 1) // 2), SUB)
    tile_r = max(SUB, min(target_rows, half_rows))

    R_pad = _round_up(R, 2 * tile_r)
    num_tiles = R_pad // (2 * tile_r)  # grid steps per parallel half
    D_pad = R_pad * LANES

    # Zero-padding is exact for dice sums (contributes 0 to x*t, x, t).
    if D_pad != D:
        x = jnp.pad(x, ((0, 0), (0, D_pad - D)))
        t = jnp.pad(t, ((0, 0), (0, D_pad - D)))
    x3 = x.reshape(N, R_pad, LANES)
    t3 = t.reshape(N, R_pad, LANES)

    # Explicit, portable VMEM budget: 2 inputs x 2 pipeline buffers + slack,
    # capped well under v7x's 64 MiB physical VMEM.
    block_bytes = N * tile_r * LANES * (x_bytes + t_bytes)
    vmem_limit = int(min(48 << 20, max(24 << 20, 2 * block_bytes + (8 << 20))))

    in_map = lambda p, k: (0, p * num_tiles + k, 0)
    out_map = lambda p, k: (p, 0, 0)

    partial_inter, partial_denom = pl.pallas_call(
        _dice_kernel,
        out_shape=(
            jax.ShapeDtypeStruct((2, N, 1), jnp.float32),
            jax.ShapeDtypeStruct((2, N, 1), jnp.float32),
        ),
        grid_spec=pltpu.PrefetchScalarGridSpec(
            num_scalar_prefetch=0,
            grid=(2, num_tiles),
            in_specs=[
                pl.BlockSpec((N, tile_r, LANES), in_map),
                pl.BlockSpec((N, tile_r, LANES), in_map),
            ],
            out_specs=[
                pl.BlockSpec((1, N, 1), out_map),
                pl.BlockSpec((1, N, 1), out_map),
            ],
            scratch_shapes=[
                pltpu.VMEM((N, LANES), jnp.float32),  # lane-partial intersection
                pltpu.VMEM((N, LANES), jnp.float32),  # lane-partial (x + t) sum
            ],
        ),
        compiler_params=pltpu.CompilerParams(
            dimension_semantics=("parallel", "arbitrary"),
            vmem_limit_bytes=vmem_limit,
        ),
    )(x3, t3)

    # Tiny final combine (per-sample dice + mean) in plain JAX.
    inter = jnp.sum(partial_inter, axis=0).reshape(N)
    denom = jnp.sum(partial_denom, axis=0).reshape(N)
    smooth = jnp.float32(1.0)
    per_sample = (2.0 * inter + smooth) / (denom + smooth)
    return (1.0 - jnp.mean(per_sample)).astype(jnp.float32)


def _dice_loss_ref(inp, target):
    N = inp.shape[0]
    x = inp.reshape(N, -1).astype(jnp.float32)
    t = target.reshape(N, -1).astype(jnp.float32)
    smooth = 1.0
    inter = jnp.sum(x * t, axis=1)
    per = (2.0 * inter + smooth) / (jnp.sum(x, axis=1) + jnp.sum(t, axis=1) + smooth)
    return 1.0 - jnp.mean(per)


if __name__ == "__main__":
    key = jax.random.PRNGKey(0)
    k1, k2 = jax.random.split(key)
    N, C, H, W = 2, 4, 16, 16  # NCHW, like the PyTorch module's inputs
    inp = jax.nn.sigmoid(jax.random.normal(k1, (N, C, H, W), dtype=jnp.float32))
    tgt = (jax.random.uniform(k2, (N, C, H, W)) > 0.5).astype(jnp.float32)

    loss = dice_loss(inp, tgt)
    loss = jax.block_until_ready(loss)

    ref = _dice_loss_ref(inp, tgt)
    assert jnp.allclose(loss, ref, atol=1e-5, rtol=1e-5), (loss, ref)

    print("KERNEL_OK")
</pallas_src>

<mosaic_0001>
module attributes {stable_mosaic.version = 11 : i64} {
  func.func @_dice_kernel(%arg0: i32, %arg1: i32, %arg2: memref<2x16x128xf32, #tpu.memory_space<vmem>>, %arg3: memref<2x16x128xf32, #tpu.memory_space<vmem>>, %arg4: memref<1x2x1xf32, #tpu.memory_space<vmem>>, %arg5: memref<1x2x1xf32, #tpu.memory_space<vmem>>, %arg6: memref<2x128xf32, #tpu.memory_space<vmem>>, %arg7: memref<2x128xf32, #tpu.memory_space<vmem>>) attributes {dimension_semantics = [#tpu.dimension_semantics<parallel>, #tpu.dimension_semantics<arbitrary>], iteration_bounds = array<i64: 2, 1>, scalar_prefetch = 0 : i64, scratch_operands = 2 : i64, tpu.core_type = #tpu.core_type<tc>, window_params = [{transform_indices = @transform_0, window_bounds = array<i64: 2, 16, 128>}, {transform_indices = @transform_1, window_bounds = array<i64: 2, 16, 128>}, {transform_indices = @transform_2, window_bounds = array<i64: 1, 2, 1>}, {transform_indices = @transform_3, window_bounds = array<i64: 1, 2, 1>}]} {
    %c0_i32 = arith.constant 0 : i32
    %0 = arith.cmpi eq, %arg1, %c0_i32 : i32
    %1 = arith.extui %0 : i1 to i32
    %c0_i32_0 = arith.constant 0 : i32
    %2 = arith.cmpi ne, %1, %c0_i32_0 : i32
    scf.if %2 {
      %cst_17 = arith.constant 0.000000e+00 : f32
      %18 = vector.broadcast %cst_17 : f32 to vector<2x128xf32>
      %c0_18 = arith.constant 0 : index
      %c0_19 = arith.constant 0 : index
      %19 = vector.load %arg6[%c0_18, %c0_19] : memref<2x128xf32, #tpu.memory_space<vmem>>, vector<2x128xf32>
      tpu.vector_store %arg6[%c0_18, %c0_19], %18 {strides = array<i32>} : memref<2x128xf32, #tpu.memory_space<vmem>>, vector<2x128xf32>,
      %cst_20 = arith.constant 0.000000e+00 : f32
      %20 = vector.broadcast %cst_20 : f32 to vector<2x128xf32>
      %c0_21 = arith.constant 0 : index
      %c0_22 = arith.constant 0 : index
      %21 = vector.load %arg7[%c0_21, %c0_22] : memref<2x128xf32, #tpu.memory_space<vmem>>, vector<2x128xf32>
      tpu.vector_store %arg7[%c0_21, %c0_22], %20 {strides = array<i32>} : memref<2x128xf32, #tpu.memory_space<vmem>>, vector<2x128xf32>,
    } else {
    }
    %c0 = arith.constant 0 : index
    %c0_1 = arith.constant 0 : index
    %c0_2 = arith.constant 0 : index
    %3 = vector.load %arg2[%c0, %c0_1, %c0_2] : memref<2x16x128xf32, #tpu.memory_space<vmem>>, vector<2x16x128xf32>
    %c0_3 = arith.constant 0 : index
    %c0_4 = arith.constant 0 : index
    %c0_5 = arith.constant 0 : index
    %4 = vector.load %arg3[%c0_3, %c0_4, %c0_5] : memref<2x16x128xf32, #tpu.memory_space<vmem>>, vector<2x16x128xf32>
    %c0_6 = arith.constant 0 : index
    %c0_7 = arith.constant 0 : index
    %5 = vector.load %arg6[%c0_6, %c0_7] : memref<2x128xf32, #tpu.memory_space<vmem>>, vector<2x128xf32>
    %6 = arith.mulf %3, %4 : vector<2x16x128xf32>
    %cst = arith.constant dense<0.000000e+00> : vector<2x128xf32>
    %7 = vector.multi_reduction <add>, %6, %cst [1] : vector<2x16x128xf32> to vector<2x128xf32>
    %8 = arith.addf %5, %7 : vector<2x128xf32>
    %c0_8 = arith.constant 0 : index
    %c0_9 = arith.constant 0 : index
    %9 = vector.load %arg6[%c0_8, %c0_9] : memref<2x128xf32, #tpu.memory_space<vmem>>, vector<2x128xf32>
    tpu.vector_store %arg6[%c0_8, %c0_9], %8 {strides = array<i32>} : memref<2x128xf32, #tpu.memory_space<vmem>>, vector<2x128xf32>,
    %c0_10 = arith.constant 0 : index
    %c0_11 = arith.constant 0 : index
    %10 = vector.load %arg7[%c0_10, %c0_11] : memref<2x128xf32, #tpu.memory_space<vmem>>, vector<2x128xf32>
    %11 = arith.addf %3, %4 : vector<2x16x128xf32>
    %cst_12 = arith.constant dense<0.000000e+00> : vector<2x128xf32>
    %12 = vector.multi_reduction <add>, %11, %cst_12 [1] : vector<2x16x128xf32> to vector<2x128xf32>
    %13 = arith.addf %10, %12 : vector<2x128xf32>
    %c0_13 = arith.constant 0 : index
    %c0_14 = arith.constant 0 : index
    %14 = vector.load %arg7[%c0_13, %c0_14] : memref<2x128xf32, #tpu.memory_space<vmem>>, vector<2x128xf32>
    tpu.vector_store %arg7[%c0_13, %c0_14], %13 {strides = array<i32>} : memref<2x128xf32, #tpu.memory_space<vmem>>, vector<2x128xf32>,
    %c0_i32_15 = arith.constant 0 : i32
    %15 = arith.cmpi eq, %arg1, %c0_i32_15 : i32
    %16 = arith.extui %15 : i1 to i32
    %c0_i32_16 = arith.constant 0 : i32
    %17 = arith.cmpi ne, %16, %c0_i32_16 : i32
    scf.if %17 {
      %c0_17 = arith.constant 0 : index
      %c0_18 = arith.constant 0 : index
      %18 = vector.load %arg6[%c0_17, %c0_18] : memref<2x128xf32, #tpu.memory_space<vmem>>, vector<2x128xf32>
      %cst_19 = arith.constant dense<0.000000e+00> : vector<2xf32>
      %19 = vector.multi_reduction <add>, %18, %cst_19 [1] : vector<2x128xf32> to vector<2xf32>
      %20 = vector.shape_cast %19 : vector<2xf32> to vector<1x2x1xf32>
      %c0_20 = arith.constant 0 : index
      %c0_21 = arith.constant 0 : index
      %c0_22 = arith.constant 0 : index
      %21 = vector.load %arg4[%c0_20, %c0_21, %c0_22] : memref<1x2x1xf32, #tpu.memory_space<vmem>>, vector<1x2x1xf32>
      tpu.vector_store %arg4[%c0_20, %c0_21, %c0_22], %20 {strides = array<i32>} : memref<1x2x1xf32, #tpu.memory_space<vmem>>, vector<1x2x1xf32>,
      %c0_23 = arith.constant 0 : index
      %c0_24 = arith.constant 0 : index
      %22 = vector.load %arg7[%c0_23, %c0_24] : memref<2x128xf32, #tpu.memory_space<vmem>>, vector<2x128xf32>
      %cst_25 = arith.constant dense<0.000000e+00> : vector<2xf32>
      %23 = vector.multi_reduction <add>, %22, %cst_25 [1] : vector<2x128xf32> to vector<2xf32>
      %24 = vector.shape_cast %23 : vector<2xf32> to vector<1x2x1xf32>
      %c0_26 = arith.constant 0 : index
      %c0_27 = arith.constant 0 : index
      %c0_28 = arith.constant 0 : index
      %25 = vector.load %arg5[%c0_26, %c0_27, %c0_28] : memref<1x2x1xf32, #tpu.memory_space<vmem>>, vector<1x2x1xf32>
      tpu.vector_store %arg5[%c0_26, %c0_27, %c0_28], %24 {strides = array<i32>} : memref<1x2x1xf32, #tpu.memory_space<vmem>>, vector<1x2x1xf32>,
    } else {
    }
    return
  }
  func.func @transform_0(%arg0: i32, %arg1: i32) -> (i32, i32, i32) {
    %c1_i32 = arith.constant 1 : i32
    %0 = arith.muli %arg0, %c1_i32 : i32
    %1 = arith.addi %0, %arg1 : i32
    %c0_i32 = arith.constant 0 : i32
    %c0_i32_0 = arith.constant 0 : i32
    %c0_i32_1 = arith.constant 0 : i32
    return %c0_i32, %1, %c0_i32_0 : i32, i32, i32
  }
  func.func @transform_1(%arg0: i32, %arg1: i32) -> (i32, i32, i32) {
    %c1_i32 = arith.constant 1 : i32
    %0 = arith.muli %arg0, %c1_i32 : i32
    %1 = arith.addi %0, %arg1 : i32
    %c0_i32 = arith.constant 0 : i32
    %c0_i32_0 = arith.constant 0 : i32
    %c0_i32_1 = arith.constant 0 : i32
    return %c0_i32, %1, %c0_i32_0 : i32, i32, i32
  }
  func.func @transform_2(%arg0: i32, %arg1: i32) -> (i32, i32, i32) {
    %c0_i32 = arith.constant 0 : i32
    %c0_i32_0 = arith.constant 0 : i32
    %c0_i32_1 = arith.constant 0 : i32
    return %arg0, %c0_i32, %c0_i32_0 : i32, i32, i32
  }
  func.func @transform_3(%arg0: i32, %arg1: i32) -> (i32, i32, i32) {
    %c0_i32 = arith.constant 0 : i32
    %c0_i32_0 = arith.constant 0 : i32
    %c0_i32_1 = arith.constant 0 : i32
    return %arg0, %c0_i32, %c0_i32_0 : i32, i32, i32
  }
}

</mosaic_0001>

<llo_original>
// kernel: tpu_custom_call.1
$region0: #{tpu_custom_call.1}
  #allocation0 [shape = 'u32[]', space=smem, size = 0x4, offset = 0x4, fixed_abs, tag = 'smem constant byte address 0x4 - core index']
  #allocation1 [shape = 'u32[144,128]{1,0:T(1,128)}', space=vmem, size = 0x12000, scoped, tag = 'internal scratch']
  #allocation2 [shape = 'f32[2,128]{1,0:T(2,128)}', space=vmem, size = 0x400, scoped, tag = 'scratch operand']
  #allocation3 [shape = 'f32[2,128]{1,0:T(2,128)}', space=vmem, size = 0x400, scoped, tag = 'scratch operand']
  #allocation8 [shape = 's32[]', space=sflag, size = 0x4, offset = 0, fixed_abs, tag = 'sflag constant byte address 0x0 - dummy sync flag']
  #allocation10 [shape = 's32[]', space=sflag, size = 0x4, offset = 0, fixed_abs, tag = 'sflag constant byte address 0x0 - dummy sync flag']
  %s0 = inlined_call_operand.hbm [shape: f32[2,32,128], index: 0, kind: input, shape index: {}]
  %s1 = inlined_call_operand.hbm [shape: f32[2,32,128], index: 1, kind: input, shape index: {}]
  %s2 = inlined_call_operand.vmem [shape: f32[2,2,1], index: 2, kind: output, shape index: {0}]
  %s3 = inlined_call_operand.vmem [shape: f32[2,2,1], index: 3, kind: output, shape index: {1}]
  %4 = xla_tuple %s2, %s3
  %s5 = sld [smem:[#allocation0]]
  $region65: #{tpu_custom_call.1} parent=0
    _
  %s7 = ssub.s32 1, %s5
  %s8 = scalar_select 0, %s7, %s5
  $region1: #{tpu_custom_call.1} parent=0
    #allocation4 [shape = 'u8[32768]{0}', space=vmem, size = 0x8000, scoped, tag = 'input window, operand 0']
    #allocation5 [shape = 's32[2]{0}', space=sflag, size = 0x8, scoped, tag = 'scoped memory for tpu_custom_call.1']
    #allocation6 [shape = 'u8[32768]{0}', space=vmem, size = 0x8000, scoped, tag = 'input window, operand 1']
    #allocation7 [shape = 's32[2]{0}', space=sflag, size = 0x8, scoped, tag = 'scoped memory for tpu_custom_call.1']
    %9 = vsyncpa [#allocation5], 0
    %s10 = scalar_lea.sflag [#allocation5], 1
    %11 = vsyncpa %s10, 0
    %12 = vsyncpa [#allocation7], 0
    %s13 = scalar_lea.sflag [#allocation7], 1
    %14 = vsyncpa %s13, 0
    loop: start=0, step=1, limit=4
    $region2: #{tpu_custom_call.1} parent=1 // loop_pre_header
      _
    $region3: #{tpu_custom_call.1} parent=1 // loop_header
      %s16 = sphi 0, %s20
      %p17 = scmp.ge.s32.totalorder %s16, 4
      %s23 = sphi 0, %s35
      %s24 = sphi 0, %s31
      %s25 = sphi 0, %s23
      %s26 = sphi 0, %s24
      %s27 = sphi 0, %s25
      %s28 = sphi 0, %s26
      %s40 = sphi 0, %s42
      %s43 = sphi 0, %s40
      %s44 = sphi 0, %s43
      %s60 = sphi 0, %s44
      %s68 = sphi 0, %s70
      %s71 = sphi 0, %s68
      %s72 = sphi 0, %s71
      %s88 = sphi 0, %s72
      %s94 = sphi 0, %s96
      %s97 = sphi 0, %s94
      %s98 = sphi 0, %s97
      %s114 = sphi 0, %s98
      %s120 = sphi 0, %s122
      %s123 = sphi 0, %s120
      %s124 = sphi 0, %s123
      %s140 = sphi 0, %s124
    $region4: #{tpu_custom_call.1} parent=1 // loop_header_branch
      %19 = sbr.rel (%p17) target = $region8
    $region5: #{tpu_custom_call.1} parent=1 // loop_body
      %s21 = ssub.s32 %s16, 1
      %s22 = ssub.s32 %s16, 2
      %s29 = sadd.s32 1, %s24
      %p30 = scmp.ge.s32.totalorder %s29, 1
      %s31 = scalar_select %p30, 0, %s29
      %s32 = sadd.s32 1, %s23
      %s33 = scalar_select %p30, %s32, %s23
      %p34 = scmp.ge.s32.totalorder %s33, 2
      %s35 = scalar_select %p34, 0, %s33
      %s36 = sadd.s32 %s23, %s24
      %s37 = sadd.s32 %s35, %s31
      %s38 = ssub.s32 %s36, %s37
      %p39 = scmp.eq.s32.totalorder %s38, 0
      %s41 = sadd.s32 %s40, 1
      %s42 = scalar_select %p39, %s40, %s41
      %p45 = pneg %p39
      %p46 = scmp.eq.s32.totalorder %s16, 1
      %p47 = por %p45, %p46
      %p48 = scmp.ne.s32.totalorder %s40, %s43
      %p49 = scmp.eq.s32.totalorder %s16, 0
      %p50 = por %p48, %p49
      %p51 = scmp.ne.s32.totalorder %s40, %s43
      %p52 = scmp.eq.s32.totalorder %s21, 1
      %p53 = por %p51, %p52
      %p54 = scmp.ne.s32.totalorder %s43, %s44
      %p55 = scmp.eq.s32.totalorder %s21, 0
      %p56 = por %p54, %p55
      %p57 = scmp.ne.s32.totalorder %s43, %s44
      %p58 = scmp.eq.s32.totalorder %s22, 1
      %p59 = por %p57, %p58
      %p61 = scmp.ne.s32.totalorder %s44, %s60
      %p62 = scmp.eq.s32.totalorder %s22, 0
      %p63 = por %p61, %p62
      %s64 = sadd.s32 %s23, %s24
      %s65 = sadd.s32 %s35, %s31
      %s66 = ssub.s32 %s64, %s65
      %p67 = scmp.eq.s32.totalorder %s66, 0
      %s69 = sadd.s32 %s68, 1
      %s70 = scalar_select %p67, %s68, %s69
      %p73 = pneg %p67
      %p74 = scmp.eq.s32.totalorder %s16, 1
      %p75 = por %p73, %p74
      %p76 = scmp.ne.s32.totalorder %s68, %s71
      %p77 = scmp.eq.s32.totalorder %s16, 0
      %p78 = por %p76, %p77
      %p79 = scmp.ne.s32.totalorder %s68, %s71
      %p80 = scmp.eq.s32.totalorder %s21, 1
      %p81 = por %p79, %p80
      %p82 = scmp.ne.s32.totalorder %s71, %s72
      %p83 = scmp.eq.s32.totalorder %s21, 0
      %p84 = por %p82, %p83
      %p85 = scmp.ne.s32.totalorder %s71, %s72
      %p86 = scmp.eq.s32.totalorder %s22, 1
      %p87 = por %p85, %p86
      %p89 = scmp.ne.s32.totalorder %s72, %s88
      %p90 = scmp.eq.s32.totalorder %s22, 0
      %p91 = por %p89, %p90
      %s92 = ssub.s32 %s23, %s35
      %p93 = scmp.eq.s32.totalorder %s92, 0
      %s95 = sadd.s32 %s94, 1
      %s96 = scalar_select %p93, %s94, %s95
      %p99 = pneg %p93
      %p100 = scmp.eq.s32.totalorder %s16, 1
      %p101 = por %p99, %p100
      %p102 = scmp.ne.s32.totalorder %s94, %s97
      %p103 = scmp.eq.s32.totalorder %s16, 0
      %p104 = por %p102, %p103
      %p105 = scmp.ne.s32.totalorder %s94, %s97
      %p106 = scmp.eq.s32.totalorder %s21, 1
      %p107 = por %p105, %p106
      %p108 = scmp.ne.s32.totalorder %s97, %s98
      %p109 = scmp.eq.s32.totalorder %s21, 0
      %p110 = por %p108, %p109
      %p111 = scmp.ne.s32.totalorder %s97, %s98
      %p112 = scmp.eq.s32.totalorder %s22, 1
      %p113 = por %p111, %p112
      %p115 = scmp.ne.s32.totalorder %s98, %s114
      %p116 = scmp.eq.s32.totalorder %s22, 0
      %p117 = por %p115, %p116
      %s118 = ssub.s32 %s23, %s35
      %p119 = scmp.eq.s32.totalorder %s118, 0
      %s121 = sadd.s32 %s120, 1
      %s122 = scalar_select %p119, %s120, %s121
      %p125 = pneg %p119
      %p126 = scmp.eq.s32.totalorder %s16, 1
      %p127 = por %p125, %p126
      %p128 = scmp.ne.s32.totalorder %s120, %s123
      %p129 = scmp.eq.s32.totalorder %s16, 0
      %p130 = por %p128, %p129
      %p131 = scmp.ne.s32.totalorder %s120, %s123
      %p132 = scmp.eq.s32.totalorder %s21, 1
      %p133 = por %p131, %p132
      %p134 = scmp.ne.s32.totalorder %s123, %s124
      %p135 = scmp.eq.s32.totalorder %s21, 0
      %p136 = por %p134, %p135
      %p137 = scmp.ne.s32.totalorder %s123, %s124
      %p138 = scmp.eq.s32.totalorder %s22, 1
      %p139 = por %p137, %p138
      %p141 = scmp.ne.s32.totalorder %s124, %s140
      %p142 = scmp.eq.s32.totalorder %s22, 0
      %p143 = por %p141, %p142
      %p144 = scmp.le.s32.totalorder 1, %s16
      %p145 = scmp.lt.s32.totalorder %s16, 3
      %p146 = pnand %p144, %p145
      %p147 = pneg %p146
      // Predicated region
      $region9: #{tpu_custom_call.1} parent=5 // pred_check
        _
      $region10: #{tpu_custom_call.1} parent=5 // pred_check_branch
        %149 = sbr.rel (%p146) target = $region12
      $region11: #{tpu_custom_call.1} parent=5 // pred_region
        %s150 = ssub.s32 %s16, 1
      $region12: #{tpu_custom_call.1} parent=5 // pred_fallthru
        _
      %p151 = scmp.lt.s32.totalorder %s16, 2
      // Predicated region
      $region13: #{tpu_custom_call.1} parent=5 // pred_check
        %p152 = pneg %p151
      $region14: #{tpu_custom_call.1} parent=5 // pred_check_branch
        %154 = sbr.rel (%p152) target = $region16
      $region15: #{tpu_custom_call.1} parent=5 // pred_region
        // Predicated region
        $region17: #{tpu_custom_call.1} parent=15 // pred_check
          %p155 = pneg %p50
        $region18: #{tpu_custom_call.1} parent=15 // pred_check_branch
          %157 = sbr.rel (%p155) target = $region20
        $region19: #{tpu_custom_call.1} parent=15 // pred_region
          #allocation9 [shape = 'u32[6]{0}', space=smem, size = 0x18, scoped, tag = 'DMA stride descriptor']
          %s158 = sand.u32 %s40, 1
          %s159 = scalar_lea.sflag [#allocation5], %s158
          %s160 = sand.u32 %s40, 1
          %s161 = smul.addr %s160, 32
          %s162 = scalar_lea.vmem [#allocation4], %s161
          %s163 = sadd.s32 %s23, %s24
          %s164 = smul.u32 2, %s163
          %s166 = ssub.s32 512, 512
          %167 = vsyncadd %s159, %s166
          %s168 = smul.addr %s164, 128
          %s169 = scalar_lea.hbm %s0, %s168
          %s171 = sshll.u32 1, 14
          %s172 = sxor.u32 4294967295, %s171
          %s174 = sld [smem:[#allocation0]]
          %s175 = sadd.s32 2, %s174
          %s177 = sshll.u32 7, 26
          %s178 = sxor.u32 4294967295, %s177
          %s179 = sand.u32 0, %s178
          %s180 = sshll.u32 %s175, 26
          %s181 = sor.u32 %s179, %s180
          %s182 = sshll.u32 %s162, 4
          %s183 = int_to_ptr.vmem [resolvable:$true] %s182
          %189 = sst [smem:[#allocation9]] 512
          %s190 = scalar_lea.smem [#allocation9], 1
          %191 = sst [smem:[%s190]] 256
          %s192 = scalar_lea.smem [#allocation9], 2
          %193 = sst [smem:[%s192]] 2
          %s194 = scalar_lea.smem [#allocation9], 3
          %195 = sst [smem:[%s194]] 128
          %s196 = scalar_lea.smem [#allocation9], 4
          %197 = sst [smem:[%s196]] 128
          %s198 = scalar_lea.smem [#allocation9], 5
          %199 = sst [smem:[%s198]] 8
          %201 = dma.general %s169, 512, %s183, %s159, [#allocation8], [#allocation9], %s181, 0
        $region20: #{tpu_custom_call.1} parent=15 // pred_fallthru
          _
        // Predicated region
        $region21: #{tpu_custom_call.1} parent=15 // pred_check
          %p202 = pneg %p78
        $region22: #{tpu_custom_call.1} parent=15 // pred_check_branch
          %204 = sbr.rel (%p202) target = $region24
        $region23: #{tpu_custom_call.1} parent=15 // pred_region
          #allocation11 [shape = 'u32[6]{0}', space=smem, size = 0x18, scoped, tag = 'DMA stride descriptor']
          %s205 = sand.u32 %s68, 1
          %s206 = scalar_lea.sflag [#allocation7], %s205
          %s207 = sand.u32 %s68, 1
          %s208 = smul.addr %s207, 32
          %s209 = scalar_lea.vmem [#allocation6], %s208
          %s210 = sadd.s32 %s23, %s24
          %s211 = smul.u32 2, %s210
          %s213 = ssub.s32 512, 512
          %214 = vsyncadd %s206, %s213
          %s215 = smul.addr %s211, 128
          %s216 = scalar_lea.hbm %s1, %s215
          %s218 = sshll.u32 1, 14
          %s219 = sxor.u32 4294967295, %s218
          %s221 = sld [smem:[#allocation0]]
          %s222 = sadd.s32 2, %s221
          %s224 = sshll.u32 7, 26
          %s225 = sxor.u32 4294967295, %s224
          %s226 = sand.u32 0, %s225
          %s227 = sshll.u32 %s222, 26
          %s228 = sor.u32 %s226, %s227
          %s229 = sshll.u32 %s209, 4
          %s230 = int_to_ptr.vmem [resolvable:$true] %s229
          %236 = sst [smem:[#allocation11]] 512
          %s237 = scalar_lea.smem [#allocation11], 1
          %238 = sst [smem:[%s237]] 256
          %s239 = scalar_lea.smem [#allocation11], 2
          %240 = sst [smem:[%s239]] 2
          %s241 = scalar_lea.smem [#allocation11], 3
          %242 = sst [smem:[%s241]] 128
          %s243 = scalar_lea.smem [#allocation11], 4
          %244 = sst [smem:[%s243]] 128
          %s245 = scalar_lea.smem [#allocation11], 5
          %246 = sst [smem:[%s245]] 8
          %248 = dma.general %s216, 512, %s230, %s206, [#allocation10], [#allocation11], %s228, 0
        $region24: #{tpu_custom_call.1} parent=15 // pred_fallthru
          _
      $region16: #{tpu_custom_call.1} parent=5 // pred_fallthru
        _
      %p249 = scmp.le.s32.totalorder 1, %s16
      %p250 = scmp.lt.s32.totalorder %s16, 3
      %p251 = pnand %p249, %p250
      %p252 = pneg %p251
      // Predicated region
      $region25: #{tpu_custom_call.1} parent=5 // pred_check
        _
      $region26: #{tpu_custom_call.1} parent=5 // pred_check_branch
        %254 = sbr.rel (%p251) target = $region28
      $region27: #{tpu_custom_call.1} parent=5 // pred_region
        %s255 = ssub.s32 %s16, 1
        %s256 = sand.u32 %s43, 1
        %s257 = scalar_lea.sflag [#allocation5], %s256
        %s258 = sand.u32 %s43, 1
        %s259 = smul.addr %s258, 32
        %s260 = scalar_lea.vmem [#allocation4], %s259
        // Predicated region
        $region29: #{tpu_custom_call.1} parent=27 // pred_check
          %p261 = pneg %p56
        $region30: #{tpu_custom_call.1} parent=27 // pred_check_branch
          %263 = sbr.rel (%p261) target = $region32
        $region31: #{tpu_custom_call.1} parent=27 // pred_region
          %264 = dma.done %s257, 512
        $region32: #{tpu_custom_call.1} parent=27 // pred_fallthru
          _
        %s265 = sand.u32 %s71, 1
        %s266 = scalar_lea.sflag [#allocation7], %s265
        %s267 = sand.u32 %s71, 1
        %s268 = smul.addr %s267, 32
        %s269 = scalar_lea.vmem [#allocation6], %s268
        // Predicated region
        $region33: #{tpu_custom_call.1} parent=27 // pred_check
          %p270 = pneg %p84
        $region34: #{tpu_custom_call.1} parent=27 // pred_check_branch
          %272 = sbr.rel (%p270) target = $region36
        $region35: #{tpu_custom_call.1} parent=27 // pred_region
          %273 = dma.done %s266, 512
        $region36: #{tpu_custom_call.1} parent=27 // pred_fallthru
          _
        %s274 = sand.u32 %s43, 1
        %s275 = scalar_lea.sflag [#allocation5], %s274
        %s276 = sand.u32 %s43, 1
        %s277 = smul.addr %s276, 32
        %s278 = scalar_lea.vmem [#allocation4], %s277
        %p279 = pneg %p56
        %p280 = pneg %p53
        %s281 = sand.u32 %s71, 1
        %s282 = scalar_lea.sflag [#allocation7], %s281
        %s283 = sand.u32 %s71, 1
        %s284 = smul.addr %s283, 32
        %s285 = scalar_lea.vmem [#allocation6], %s284
        %p286 = pneg %p84
        %p287 = pneg %p81
        %p288 = pneg %p110
        %p289 = pneg %p107
        %p290 = scmp.lt.s32.totalorder %s25, 1
        %s291 = scalar_select %p290, %s25, 1
        %s292 = smul.addr %s291, 2
        %s293 = scalar_lea.vmem %s2, %s292
        %p294 = pneg %p136
        %p295 = pneg %p133
        %p296 = scmp.lt.s32.totalorder %s25, 1
        %s297 = scalar_select %p296, %s25, 1
        %s298 = smul.addr %s297, 2
        %s299 = scalar_lea.vmem %s3, %s298
        %s300 = sadd.s32 %s25, %s26
        %s301 = smul.u32 2, %s300
        %s302 = sadd.s32 %s25, %s26
        %s303 = smul.u32 2, %s302
        %p304 = scmp.lt.s32.totalorder %s25, 1
        %s305 = scalar_select %p304, %s25, 1
        %s306 = smul.addr %s305, 2
        %s307 = scalar_lea.vmem %s2, %s306
        %p308 = scmp.lt.s32.totalorder %s25, 1
        %s309 = scalar_select %p308, %s25, 1
        %s310 = smul.addr %s309, 2
        %s311 = scalar_lea.vmem %s3, %s310
        %p312 = scmp.eq.s32.totalorder %s26, 0
        // Predicated region
        $region37: #{tpu_custom_call.1} parent=27 // pred_check
          %p313 = pneg %p312
        $region38: #{tpu_custom_call.1} parent=27 // pred_check_branch
          %315 = sbr.rel (%p313) target = $region40
        $region39: #{tpu_custom_call.1} parent=27 // pred_region
          %316 = vst [vmem:[#allocation2] sm:$0x3] 0.0
          %317 = vst [vmem:[#allocation3] sm:$0x3] 0.0
        $region40: #{tpu_custom_call.1} parent=27 // pred_fallthru
          _
        %v318 = vld [vmem:[%s260] sm:$0xff]
        %v319 = vld [vmem:[%s260 + $0x8] sm:$0xff]
        %v320 = vld [vmem:[%s260 + $0x10] sm:$0xff]
        %v321 = vld [vmem:[%s260 + $0x18] sm:$0xff]
        %v322 = vld [vmem:[%s269] sm:$0xff]
        %v323 = vld [vmem:[%s269 + $0x8] sm:$0xff]
        %v324 = vld [vmem:[%s269 + $0x10] sm:$0xff]
        %v325 = vld [vmem:[%s269 + $0x18] sm:$0xff]
        %v326 = vld [vmem:[#allocation2] sm:$0x3]
        %v327 = vmul.f32 %v318, %v322
        %v328 = vmul.f32 %v319, %v323
        %v329 = vmul.f32 %v320, %v324
        %v330 = vmul.f32 %v321, %v325
        %v331 = vadd.f32 %v327, %v328
        %v332 = vrot.slane %v331, 4
        %v333 = vadd.f32 %v331, %v332
        %v334 = vrot.slane %v333, 2
        %v335 = vadd.f32 %v333, %v334
        %v336 = vrot.slane %v335, 1
        %v337 = vadd.f32 %v335, %v336
        %v338 = vadd.f32 %v329, %v330
        %v339 = vrot.slane %v338, 4
        %v340 = vadd.f32 %v338, %v339
        %v341 = vrot.slane %v340, 2
        %v342 = vadd.f32 %v340, %v341
        %v343 = vrot.slane %v342, 1
        %v344 = vadd.f32 %v342, %v343
        %vm347 = vcmask 1041409
        %v348 = vsel %vm347, %v344, %v337
        %v350 = vadd.f32 %v326, %v348
        %351 = vst [vmem:[#allocation2] sm:$0x3] %v350
        %v352 = vld [vmem:[#allocation3] sm:$0x3]
        %v353 = vadd.f32 %v318, %v322
        %v354 = vadd.f32 %v319, %v323
        %v355 = vadd.f32 %v320, %v324
        %v356 = vadd.f32 %v321, %v325
        %v357 = vadd.f32 %v353, %v354
        %v358 = vrot.slane %v357, 4
        %v359 = vadd.f32 %v357, %v358
        %v360 = vrot.slane %v359, 2
        %v361 = vadd.f32 %v359, %v360
        %v362 = vrot.slane %v361, 1
        %v363 = vadd.f32 %v361, %v362
        %v364 = vadd.f32 %v355, %v356
        %v365 = vrot.slane %v364, 4
        %v366 = vadd.f32 %v364, %v365
        %v367 = vrot.slane %v366, 2
        %v368 = vadd.f32 %v366, %v367
        %v369 = vrot.slane %v368, 1
        %v370 = vadd.f32 %v368, %v369
        %v373 = vsel %vm347, %v370, %v363
        %v375 = vadd.f32 %v352, %v373
        %376 = vst [vmem:[#allocation3] sm:$0x3] %v375
        // Predicated region
        $region41: #{tpu_custom_call.1} parent=27 // pred_check
          %p377 = pneg %p312
        $region42: #{tpu_custom_call.1} parent=27 // pred_check_branch
          %379 = sbr.rel (%p377) target = $region44
        $region43: #{tpu_custom_call.1} parent=27 // pred_region
          %v380 = vld [vmem:[#allocation2] sm:$0x3]
          %vm381 = vcmask 1041408
          %v382 = vsel %vm381, %v380, 0.0
          %383 = vadd.xlane.f32.xlu0 %v382
          %v384 = vpop.xlane.xlu0 %383
          %vm385 = vcmask 1024
          %386 = vst.msk [vmem:[%s307] sm:$0x3] %vm385, %v384
          %v387 = vld [vmem:[#allocation3] sm:$0x3]
          %v388 = vsel %vm381, %v387, 0.0
          %389 = vadd.xlane.f32.xlu0 %v388
          %v390 = vpop.xlane.xlu0 %389
          %391 = vst.msk [vmem:[%s311] sm:$0x3] %vm385, %v390
        $region44: #{tpu_custom_call.1} parent=27 // pred_fallthru
          _
        %p392 = scmp.lt.s32.totalorder %s25, 1
        %s393 = scalar_select %p392, %s25, 1
        %s394 = smul.addr %s393, 2
        %s395 = scalar_lea.vmem %s2, %s394
        %p396 = scmp.lt.s32.totalorder %s25, 1
        %s397 = scalar_select %p396, %s25, 1
        %s398 = smul.addr %s397, 2
        %s399 = scalar_lea.vmem %s3, %s398
        // Predicated region
        $region45: #{tpu_custom_call.1} parent=27 // pred_check
          %p400 = pneg %p107
        $region46: #{tpu_custom_call.1} parent=27 // pred_check_branch
          %402 = sbr.rel (%p400) target = $region48
        $region47: #{tpu_custom_call.1} parent=27 // pred_region
          _
        $region48: #{tpu_custom_call.1} parent=27 // pred_fallthru
          _
        // Predicated region
        $region49: #{tpu_custom_call.1} parent=27 // pred_check
          %p403 = pneg %p133
        $region50: #{tpu_custom_call.1} parent=27 // pred_check_branch
          %405 = sbr.rel (%p403) target = $region52
        $region51: #{tpu_custom_call.1} parent=27 // pred_region
          _
        $region52: #{tpu_custom_call.1} parent=27 // pred_fallthru
          _
      $region28: #{tpu_custom_call.1} parent=5 // pred_fallthru
        _
      %p406 = scmp.le.s32.totalorder 2, %s16
      // Predicated region
      $region53: #{tpu_custom_call.1} parent=5 // pred_check
        %p407 = pneg %p406
      $region54: #{tpu_custom_call.1} parent=5 // pred_check_branch
        %409 = sbr.rel (%p407) target = $region56
      $region55: #{tpu_custom_call.1} parent=5 // pred_region
        %s410 = ssub.s32 %s16, 2
        // Predicated region
        $region57: #{tpu_custom_call.1} parent=55 // pred_check
          %p411 = pneg %p113
        $region58: #{tpu_custom_call.1} parent=55 // pred_check_branch
          %413 = sbr.rel (%p411) target = $region60
        $region59: #{tpu_custom_call.1} parent=55 // pred_region
          %p414 = scmp.lt.s32.totalorder %s27, 1
          %s415 = scalar_select %p414, %s27, 1
          %s416 = smul.addr %s415, 2
          %s417 = scalar_lea.vmem %s2, %s416
        $region60: #{tpu_custom_call.1} parent=55 // pred_fallthru
          _
        // Predicated region
        $region61: #{tpu_custom_call.1} parent=55 // pred_check
          %p418 = pneg %p139
        $region62: #{tpu_custom_call.1} parent=55 // pred_check_branch
          %420 = sbr.rel (%p418) target = $region64
        $region63: #{tpu_custom_call.1} parent=55 // pred_region
          %p421 = scmp.lt.s32.totalorder %s27, 1
          %s422 = scalar_select %p421, %s27, 1
          %s423 = smul.addr %s422, 2
          %s424 = scalar_lea.vmem %s3, %s423
        $region64: #{tpu_custom_call.1} parent=55 // pred_fallthru
          _
      $region56: #{tpu_custom_call.1} parent=5 // pred_fallthru
        _
    $region6: #{tpu_custom_call.1} parent=1 // loop_footer
      %s20 = sadd.s32 1, %s16
    $region7: #{tpu_custom_call.1} parent=1 // loop_footer_branch
      %15 = sbr.rel target = $region3
    $region8: #{tpu_custom_call.1} parent=1 // loop_exit
      _
    %425 = vsyncpa [#allocation5], 1
    %s426 = scalar_lea.sflag [#allocation5], 1
    %427 = vsyncpa %s426, 1
    %428 = vsyncpa [#allocation7], 1
    %s429 = scalar_lea.sflag [#allocation7], 1
    %430 = vsyncpa %s429, 1

</llo_original>
